<compile_context>
chip_gen: v6e
topology: v6e:2x2x1
jax: 0.10.0
libtpu: 0.0.40
codegen_flags: <defaults>
</compile_context>

<pallas_src>
import math

import jax
import jax.numpy as jnp
from jax.experimental import pallas as pl
from jax.experimental.pallas import tpu as pltpu


def _round_up(n: int, m: int) -> int:
    return ((n + m - 1) // m) * m


def _cdiv(a: int, b: int) -> int:
    return -(-a // b)


# --------------------------------------------------------------------------
# Kernel body
# --------------------------------------------------------------------------
def _encoder_kernel(x_ref, w1_ref, b1_ref, w2_ref, b2_ref, o_ref):
    x = x_ref[...]
    if x.dtype != jnp.bfloat16:
        # In-kernel cast only (never a standalone wrapper-side cast, which
        # would add an extra HBM pass).
        x = x.astype(jnp.bfloat16)

    # fc1: bf16 MXU inputs, f32 accumulation.
    h = jnp.dot(x, w1_ref[...], preferred_element_type=jnp.float32)
    # Bias add + tanh in f32 (VPU/EUP; v5e has no bf16 elementwise path).
    h = jnp.tanh(h + b1_ref[...])  # b1 is (1, hidden_p), broadcasts over rows.

    # fc2: cast activations to bf16 only at the dot input.
    y = jnp.dot(h.astype(jnp.bfloat16), w2_ref[...],
                preferred_element_type=jnp.float32)
    o_ref[...] = (y + b2_ref[...]).astype(o_ref.dtype)


# --------------------------------------------------------------------------
# One-time parameter preparation (hoisted out of the forward path)
# --------------------------------------------------------------------------
def prepare_encoder_params(w1, b1, w2, b2):
    """Pad + cast the fc1/fc2 parameters ONCE.

    Lane-pads hidden (200 -> 256) and out (300 -> 384) to multiples of 128 so
    both matmuls use full MXU lane tiles and the output store is an unmasked,
    lane-dense vst.  Zero padding is mathematically inert: padded hidden
    columns produce tanh(0 + 0) = 0 and hit zero rows of W2; padded output
    columns are 0 and are sliced off (or ignored) by the consumer.
    The contraction dim (input_dim) is deliberately NOT padded.
    """
    input_dim, hidden = w1.shape
    hidden2, out_dim = w2.shape
    assert hidden2 == hidden and b1.shape == (hidden,) and b2.shape == (out_dim,)

    hidden_p = _round_up(hidden, 128)
    out_p = _round_up(out_dim, 128)

    w1_p = (jnp.zeros((input_dim, hidden_p), jnp.bfloat16)
            .at[:, :hidden].set(w1.astype(jnp.bfloat16)))
    b1_p = (jnp.zeros((1, hidden_p), jnp.float32)
            .at[:, :hidden].set(b1.astype(jnp.float32).reshape(1, -1)))
    w2_p = (jnp.zeros((hidden_p, out_p), jnp.bfloat16)
            .at[:hidden, :out_dim].set(w2.astype(jnp.bfloat16)))
    b2_p = (jnp.zeros((1, out_p), jnp.float32)
            .at[:, :out_dim].set(b2.astype(jnp.float32).reshape(1, -1)))

    return {
        "w1": w1_p, "b1": b1_p, "w2": w2_p, "b2": b2_p,
        "input_dim": input_dim, "hidden": hidden, "out_dim": out_dim,
        "hidden_p": hidden_p, "out_p": out_p,
    }


# --------------------------------------------------------------------------
# Forward wrapper
# --------------------------------------------------------------------------
def encoder_forward(x, params, latent_num, latent_dim, *,
                    block_b=1024, out_dtype=jnp.float32, return_padded=False):
    """x: (B, input_dim) f32 or bf16.  params: from prepare_encoder_params().

    Returns (B, latent_num, latent_dim) in out_dtype, or the raw padded
    (B_pad, out_p) slab if return_padded=True (lets a fused consumer skip the
    slice/reshape copy over the padded output buffer).
    """
    B, input_dim = x.shape
    assert input_dim == params["input_dim"]
    out_dim = params["out_dim"]
    hidden_p, out_p = params["hidden_p"], params["out_p"]
    assert out_dim == latent_num * latent_dim

    # Batch tiling: sublane-align B.  Cap tm so there are >= 2 grid steps
    # whenever possible (keeps both v7x TensorCores busy); block_b=1024 keeps
    # double-buffered x/out + weights well under the 32 MiB default scoped
    # VMEM on every generation (raise vmem_limit_bytes if you push it higher).
    B8 = _round_up(B, 8)
    if B8 >= 16:
        tm = min(block_b, _round_up(_cdiv(B8, 2), 8))
    else:
        tm = B8
    B_pad = _round_up(B8, tm)
    if B_pad != B:
        # Padded rows compute tanh(b1)@W2+b2 garbage that is discarded below.
        x = jnp.zeros((B_pad, input_dim), x.dtype).at[:B].set(x)
    grid = (B_pad // tm,)

    y = pl.pallas_call(
        _encoder_kernel,
        out_shape=jax.ShapeDtypeStruct((B_pad, out_p), out_dtype),
        grid_spec=pltpu.PrefetchScalarGridSpec(
            num_scalar_prefetch=0,
            grid=grid,
            in_specs=[
                pl.BlockSpec((tm, input_dim), lambda i: (i, 0)),        # x tile
                pl.BlockSpec((input_dim, hidden_p), lambda i: (0, 0)),  # W1 resident
                pl.BlockSpec((1, hidden_p), lambda i: (0, 0)),          # b1 resident
                pl.BlockSpec((hidden_p, out_p), lambda i: (0, 0)),      # W2 resident
                pl.BlockSpec((1, out_p), lambda i: (0, 0)),             # b2 resident
            ],
            out_specs=pl.BlockSpec((tm, out_p), lambda i: (i, 0)),
        ),
        compiler_params=pltpu.CompilerParams(
            # Batch axis is embarrassingly parallel -> megacore sharding on v7x.
            dimension_semantics=("parallel",),
        ),
    )(x, params["w1"], params["b1"], params["w2"], params["b2"])

    if return_padded:
        return y  # (B_pad, out_p); valid data is y[:B, :out_dim]
    return y[:B, :out_dim].reshape(B, latent_num, latent_dim)


# --------------------------------------------------------------------------
# Init (PyTorch nn.Linear-style uniform +-1/sqrt(fan_in)), f32 master copy.
# --------------------------------------------------------------------------
def init_encoder_params(key, input_dim=784, hidden=200, latent_num=30, latent_dim=10):
    k1, k2, k3, k4 = jax.random.split(key, 4)
    lim1 = 1.0 / math.sqrt(input_dim)
    lim2 = 1.0 / math.sqrt(hidden)
    w1 = jax.random.uniform(k1, (input_dim, hidden), jnp.float32, -lim1, lim1)
    b1 = jax.random.uniform(k2, (hidden,), jnp.float32, -lim1, lim1)
    w2 = jax.random.uniform(k3, (hidden, latent_num * latent_dim), jnp.float32, -lim2, lim2)
    b2 = jax.random.uniform(k4, (latent_num * latent_dim,), jnp.float32, -lim2, lim2)
    return w1, b1, w2, b2


if __name__ == "__main__":
    INPUT, HIDDEN, LATENT_NUM, LATENT_DIM = 784, 200, 30, 10
    BATCH = 8

    key = jax.random.PRNGKey(0)
    kx, kp = jax.random.split(key)
    x = jax.random.normal(kx, (BATCH, INPUT), dtype=jnp.float32)
    w1, b1, w2, b2 = init_encoder_params(kp, INPUT, HIDDEN, LATENT_NUM, LATENT_DIM)

    # Pad/cast once (not per forward call).
    params = prepare_encoder_params(w1, b1, w2, b2)
    params = jax.tree_util.tree_map(
        lambda a: jax.block_until_ready(a) if isinstance(a, jax.Array) else a, params)

    out = encoder_forward(x, params, LATENT_NUM, LATENT_DIM)
    out = jax.block_until_ready(out)

    # Sanity-check against a pure-JAX f32 reference (bf16 MXU inputs -> relaxed
    # tolerance vs. a pure-f32 check).
    ref = (jnp.tanh(x @ w1 + b1) @ w2 + b2).reshape(BATCH, LATENT_NUM, LATENT_DIM)
    assert out.shape == (BATCH, LATENT_NUM, LATENT_DIM)
    assert jnp.allclose(out, ref, atol=2e-2, rtol=2e-2), (
        float(jnp.max(jnp.abs(out - ref)))
    )

    print("KERNEL_OK")
</pallas_src>

<mosaic_0001>
module attributes {stable_mosaic.version = 11 : i64} {
  func.func @_encoder_kernel(%arg0: i32, %arg1: memref<8x784xf32, #tpu.memory_space<vmem>>, %arg2: memref<784x256xbf16, #tpu.memory_space<vmem>>, %arg3: memref<1x256xf32, #tpu.memory_space<vmem>>, %arg4: memref<256x384xbf16, #tpu.memory_space<vmem>>, %arg5: memref<1x384xf32, #tpu.memory_space<vmem>>, %arg6: memref<8x384xf32, #tpu.memory_space<vmem>>) attributes {dimension_semantics = [#tpu.dimension_semantics<parallel>], iteration_bounds = array<i64: 1>, scalar_prefetch = 0 : i64, scratch_operands = 0 : i64, tpu.core_type = #tpu.core_type<tc>, window_params = [{transform_indices = @transform_0, window_bounds = array<i64: 8, 784>}, {pipeline_mode = #tpu.pipeline_mode<synchronous>, transform_indices = @transform_1, window_bounds = array<i64: 784, 256>}, {pipeline_mode = #tpu.pipeline_mode<synchronous>, transform_indices = @transform_2, window_bounds = array<i64: 1, 256>}, {pipeline_mode = #tpu.pipeline_mode<synchronous>, transform_indices = @transform_3, window_bounds = array<i64: 256, 384>}, {pipeline_mode = #tpu.pipeline_mode<synchronous>, transform_indices = @transform_4, window_bounds = array<i64: 1, 384>}, {transform_indices = @transform_5, window_bounds = array<i64: 8, 384>}]} {
    %c0 = arith.constant 0 : index
    %c0_0 = arith.constant 0 : index
    %0 = vector.load %arg1[%c0, %c0_0] : memref<8x784xf32, #tpu.memory_space<vmem>>, vector<8x784xf32>
    %1 = arith.truncf %0 : vector<8x784xf32> to vector<8x784xbf16>
    %c0_1 = arith.constant 0 : index
    %c0_2 = arith.constant 0 : index
    %2 = vector.load %arg2[%c0_1, %c0_2] : memref<784x256xbf16, #tpu.memory_space<vmem>>, vector<784x256xbf16>
    %cst = arith.constant dense<0.000000e+00> : vector<8x256xf32>
    %3 = tpu.matmul %1, %2, %cst {dimension_numbers = #tpu.dot_dimension_numbers<[1], [0], [0], [1], [0, 0, 1, 1], [], []>} : vector<8x784xbf16>, vector<784x256xbf16>, vector<8x256xf32> -> vector<8x256xf32>
    %c0_3 = arith.constant 0 : index
    %c0_4 = arith.constant 0 : index
    %4 = vector.load %arg3[%c0_3, %c0_4] : memref<1x256xf32, #tpu.memory_space<vmem>>, vector<1x256xf32>
    %5 = vector.broadcast %4 : vector<1x256xf32> to vector<8x256xf32>
    %6 = arith.addf %3, %5 : vector<8x256xf32>
    %7 = math.tanh %6 : vector<8x256xf32>
    %8 = arith.truncf %7 : vector<8x256xf32> to vector<8x256xbf16>
    %c0_5 = arith.constant 0 : index
    %c0_6 = arith.constant 0 : index
    %9 = vector.load %arg4[%c0_5, %c0_6] : memref<256x384xbf16, #tpu.memory_space<vmem>>, vector<256x384xbf16>
    %cst_7 = arith.constant dense<0.000000e+00> : vector<8x384xf32>
    %10 = tpu.matmul %8, %9, %cst_7 {dimension_numbers = #tpu.dot_dimension_numbers<[1], [0], [0], [1], [0, 0, 1, 1], [], []>} : vector<8x256xbf16>, vector<256x384xbf16>, vector<8x384xf32> -> vector<8x384xf32>
    %c0_8 = arith.constant 0 : index
    %c0_9 = arith.constant 0 : index
    %11 = vector.load %arg5[%c0_8, %c0_9] : memref<1x384xf32, #tpu.memory_space<vmem>>, vector<1x384xf32>
    %12 = vector.broadcast %11 : vector<1x384xf32> to vector<8x384xf32>
    %13 = arith.addf %10, %12 : vector<8x384xf32>
    %c0_10 = arith.constant 0 : index
    %c0_11 = arith.constant 0 : index
    %14 = vector.load %arg6[%c0_10, %c0_11] : memref<8x384xf32, #tpu.memory_space<vmem>>, vector<8x384xf32>
    tpu.vector_store %arg6[%c0_10, %c0_11], %13 {strides = array<i32>} : memref<8x384xf32, #tpu.memory_space<vmem>>, vector<8x384xf32>,
    return
  }
  func.func @transform_0(%arg0: i32) -> (i32, i32) {
    %c0_i32 = arith.constant 0 : i32
    %c0_i32_0 = arith.constant 0 : i32
    return %arg0, %c0_i32 : i32, i32
  }
  func.func @transform_1(%arg0: i32) -> (i32, i32) {
    %c0_i32 = arith.constant 0 : i32
    %c0_i32_0 = arith.constant 0 : i32
    %c0_i32_1 = arith.constant 0 : i32
    return %c0_i32, %c0_i32_0 : i32, i32
  }
  func.func @transform_2(%arg0: i32) -> (i32, i32) {
    %c0_i32 = arith.constant 0 : i32
    %c0_i32_0 = arith.constant 0 : i32
    %c0_i32_1 = arith.constant 0 : i32
    return %c0_i32, %c0_i32_0 : i32, i32
  }
  func.func @transform_3(%arg0: i32) -> (i32, i32) {
    %c0_i32 = arith.constant 0 : i32
    %c0_i32_0 = arith.constant 0 : i32
    %c0_i32_1 = arith.constant 0 : i32
    return %c0_i32, %c0_i32_0 : i32, i32
  }
  func.func @transform_4(%arg0: i32) -> (i32, i32) {
    %c0_i32 = arith.constant 0 : i32
    %c0_i32_0 = arith.constant 0 : i32
    %c0_i32_1 = arith.constant 0 : i32
    return %c0_i32, %c0_i32_0 : i32, i32
  }
  func.func @transform_5(%arg0: i32) -> (i32, i32) {
    %c0_i32 = arith.constant 0 : i32
    %c0_i32_0 = arith.constant 0 : i32
    return %arg0, %c0_i32 : i32, i32
  }
}

</mosaic_0001>

<llo_original>
// kernel: tpu_custom_call.1
$region0: #{tpu_custom_call.1}
  #allocation0 [shape = 'u32[]', space=smem, size = 0x4, offset = 0x4, fixed_abs, tag = 'smem constant byte address 0x4 - core index']
  #allocation1 [shape = 'u32[144,128]{1,0:T(1,128)}', space=vmem, size = 0x12000, scoped, tag = 'internal scratch']
  %s0 = inlined_call_operand.hbm [shape: f32[8,784], index: 0, kind: input, shape index: {}]
  %s1 = inlined_call_operand.hbm [shape: bf16[784,256], index: 1, kind: input, shape index: {}]
  %s2 = inlined_call_operand.vmem [shape: f32[1,256], index: 2, kind: input, shape index: {}]
  %s3 = inlined_call_operand.hbm [shape: bf16[256,384], index: 3, kind: input, shape index: {}]
  %s4 = inlined_call_operand.vmem [shape: f32[1,384], index: 4, kind: input, shape index: {}]
  %s5 = inlined_call_operand.hbm [shape: f32[8,384], index: 5, kind: output, shape index: {}]
  %s6 = sld [smem:[#allocation0]]
  $region42: #{tpu_custom_call.1} parent=0
    _
  %s8 = ssub.s32 1, %s6
  %s9 = scalar_select 0, %s8, %s6
  $region1: #{tpu_custom_call.1} parent=0
    #allocation2 [shape = 'u8[28672]{0}', space=vmem, size = 0x7000, scoped, tag = 'input window, operand 0, single buffered']
    #allocation3 [shape = 's32[1]{0}', space=sflag, size = 0x4, scoped, tag = 'scoped memory for tpu_custom_call.1']
    #allocation4 [shape = 's32[1]{0}', space=sflag, size = 0x4, scoped, tag = 'scoped memory for tpu_custom_call.1']
    #allocation5 [shape = 'u8[401408]{0}', space=vmem, size = 0x62000, scoped, tag = 'input window, operand 1, single buffered']
    #allocation6 [shape = 's32[1]{0}', space=sflag, size = 0x4, scoped, tag = 'scoped memory for tpu_custom_call.1']
    #allocation7 [shape = 'u8[196608]{0}', space=vmem, size = 0x30000, scoped, tag = 'input window, operand 3, single buffered']
    #allocation8 [shape = 'u8[12288]{0}', space=vmem, size = 0x3000, scoped, tag = 'output window, operand 0, single buffered']
    %10 = vsyncpa [#allocation3], 0
    %11 = vsyncpa [#allocation6], 0
    %12 = vsyncpa [#allocation4], 0
    // Predicated region
    $region2: #{tpu_custom_call.1} parent=1 // pred_check
      _
    $region3: #{tpu_custom_call.1} parent=1 // pred_check_branch
      %14 = sbr.rel (0) target = $region5
    $region4: #{tpu_custom_call.1} parent=1 // pred_region
      %s16 = ssub.s32 896, 896
      %17 = vsyncadd [#allocation3], %s16
      %s19 = sshll.u32 [#allocation2], 4
      %s20 = int_to_ptr.vmem [resolvable:$true] %s19
      %22 = dma.hbm_to_vmem [thread:$0]  %s0, 896, %s20, [#allocation3]
    $region5: #{tpu_custom_call.1} parent=1 // pred_fallthru
      _
    // Predicated region
    $region6: #{tpu_custom_call.1} parent=1 // pred_check
      _
    $region7: #{tpu_custom_call.1} parent=1 // pred_check_branch
      %24 = sbr.rel (0) target = $region9
    $region8: #{tpu_custom_call.1} parent=1 // pred_region
      %s26 = ssub.s32 12544, 12544
      %27 = vsyncadd [#allocation6], %s26
      %s28 = sshll.u32 [#allocation5], 4
      %s29 = int_to_ptr.vmem [resolvable:$true] %s28
      %34 = dma.hbm_to_vmem [thread:$0]  %s1, 12544, %s29, [#allocation6], 128, 128, 8
    $region9: #{tpu_custom_call.1} parent=1 // pred_fallthru
      _
    // Predicated region
    $region10: #{tpu_custom_call.1} parent=1 // pred_check
      _
    $region11: #{tpu_custom_call.1} parent=1 // pred_check_branch
      %36 = sbr.rel (0) target = $region13
    $region12: #{tpu_custom_call.1} parent=1 // pred_region
      _
    $region13: #{tpu_custom_call.1} parent=1 // pred_fallthru
      _
    // Predicated region
    $region14: #{tpu_custom_call.1} parent=1 // pred_check
      _
    $region15: #{tpu_custom_call.1} parent=1 // pred_check_branch
      %38 = sbr.rel (0) target = $region17
    $region16: #{tpu_custom_call.1} parent=1 // pred_region
      %s40 = ssub.s32 6144, 6144
      %41 = vsyncadd [#allocation6], %s40
      %s42 = sshll.u32 [#allocation7], 4
      %s43 = int_to_ptr.vmem [resolvable:$true] %s42
      %48 = dma.hbm_to_vmem [thread:$0]  %s3, 6144, %s43, [#allocation6], 192, 192, 12
    $region17: #{tpu_custom_call.1} parent=1 // pred_fallthru
      _
    // Predicated region
    $region18: #{tpu_custom_call.1} parent=1 // pred_check
      _
    $region19: #{tpu_custom_call.1} parent=1 // pred_check_branch
      %50 = sbr.rel (0) target = $region21
    $region20: #{tpu_custom_call.1} parent=1 // pred_region
      _
    $region21: #{tpu_custom_call.1} parent=1 // pred_fallthru
      _
    // Predicated region
    $region22: #{tpu_custom_call.1} parent=1 // pred_check
      _
    $region23: #{tpu_custom_call.1} parent=1 // pred_check_branch
      %52 = sbr.rel (0) target = $region25
    $region24: #{tpu_custom_call.1} parent=1 // pred_region
      %53 = dma.done [#allocation3], 896
    $region25: #{tpu_custom_call.1} parent=1 // pred_fallthru
      _
    // Predicated region
    $region26: #{tpu_custom_call.1} parent=1 // pred_check
      _
    $region27: #{tpu_custom_call.1} parent=1 // pred_check_branch
      %55 = sbr.rel (0) target = $region29
    $region28: #{tpu_custom_call.1} parent=1 // pred_region
      %56 = dma.done [#allocation6], 12544
    $region29: #{tpu_custom_call.1} parent=1 // pred_fallthru
      _
    // Predicated region
    $region30: #{tpu_custom_call.1} parent=1 // pred_check
      _
    $region31: #{tpu_custom_call.1} parent=1 // pred_check_branch
      %58 = sbr.rel (0) target = $region33
    $region32: #{tpu_custom_call.1} parent=1 // pred_region
      %59 = dma.done [#allocation6], 6144
    $region33: #{tpu_custom_call.1} parent=1 // pred_fallthru
      _
    %v61 = vld [vmem:[#allocation2] sm:$0xff]
    %v62 = vld [vmem:[#allocation2 + $0x8] sm:$0xff]
    %v63 = vld [vmem:[#allocation2 + $0x10] sm:$0xff]
    %v64 = vld [vmem:[#allocation2 + $0x18] sm:$0xff]
    %v65 = vld [vmem:[#allocation2 + $0x20] sm:$0xff]
    %v66 = vld [vmem:[#allocation2 + $0x28] sm:$0xff]
    %v67 = vld [vmem:[#allocation2 + $0x30] sm:$0xff]
    %v68 = vpack.c.bf16 %v61, %v61
    %v69 = vpack.c.bf16 %v62, %v62
    %v70 = vpack.c.bf16 %v63, %v63
    %v71 = vpack.c.bf16 %v64, %v64
    %v72 = vpack.c.bf16 %v65, %v65
    %v73 = vpack.c.bf16 %v66, %v66
    %v74 = vpack.c.bf16 %v67, %v67
    %v75 = vld [vmem:[#allocation5] sm:$0xff]
    %v76 = vld [vmem:[#allocation5 + $0x8] sm:$0xff]
    %v77 = vld [vmem:[#allocation5 + $0x10] sm:$0xff]
    %v78 = vld [vmem:[#allocation5 + $0x18] sm:$0xff]
    %v79 = vld [vmem:[#allocation5 + $0x20] sm:$0xff]
    %v80 = vld [vmem:[#allocation5 + $0x28] sm:$0xff]
    %v81 = vld [vmem:[#allocation5 + $0x30] sm:$0xff]
    %v82 = vld [vmem:[#allocation5 + $0x38] sm:$0xff]
    %v83 = vld [vmem:[#allocation5 + $0x40] sm:$0xff]
    %v84 = vld [vmem:[#allocation5 + $0x48] sm:$0xff]
    %v85 = vld [vmem:[#allocation5 + $0x50] sm:$0xff]
    %v86 = vld [vmem:[#allocation5 + $0x58] sm:$0xff]
    %v87 = vld [vmem:[#allocation5 + $0x60] sm:$0xff]
    %v88 = vld [vmem:[#allocation5 + $0x68] sm:$0xff]
    %v89 = vld [vmem:[#allocation5 + $0x70] sm:$0xff]
    %v90 = vld [vmem:[#allocation5 + $0x78] sm:$0xff]
    %v91 = vld [vmem:[#allocation5 + $0x80] sm:$0xff]
    %v92 = vld [vmem:[#allocation5 + $0x88] sm:$0xff]
    %v93 = vld [vmem:[#allocation5 + $0x90] sm:$0xff]
    %v94 = vld [vmem:[#allocation5 + $0x98] sm:$0xff]
    %v95 = vld [vmem:[#allocation5 + $0xa0] sm:$0xff]
    %v96 = vld [vmem:[#allocation5 + $0xa8] sm:$0xff]
    %v97 = vld [vmem:[#allocation5 + $0xb0] sm:$0xff]
    %v98 = vld [vmem:[#allocation5 + $0xb8] sm:$0xff]
    %v99 = vld [vmem:[#allocation5 + $0xc0] sm:$0xff]
    %v100 = vld [vmem:[#allocation5 + $0xc8] sm:$0xff]
    %v101 = vld [vmem:[#allocation5 + $0xd0] sm:$0xff]
    %v102 = vld [vmem:[#allocation5 + $0xd8] sm:$0xff]
    %v103 = vld [vmem:[#allocation5 + $0xe0] sm:$0xff]
    %v104 = vld [vmem:[#allocation5 + $0xe8] sm:$0xff]
    %v105 = vld [vmem:[#allocation5 + $0xf0] sm:$0xff]
    %v106 = vld [vmem:[#allocation5 + $0xf8] sm:$0xff]
    %v107 = vld [vmem:[#allocation5 + $0x100] sm:$0xff]
    %v108 = vld [vmem:[#allocation5 + $0x108] sm:$0xff]
    %v109 = vld [vmem:[#allocation5 + $0x110] sm:$0xff]
    %v110 = vld [vmem:[#allocation5 + $0x118] sm:$0xff]
    %v111 = vld [vmem:[#allocation5 + $0x120] sm:$0xff]
    %v112 = vld [vmem:[#allocation5 + $0x128] sm:$0xff]
    %v113 = vld [vmem:[#allocation5 + $0x130] sm:$0xff]
    %v114 = vld [vmem:[#allocation5 + $0x138] sm:$0xff]
    %v115 = vld [vmem:[#allocation5 + $0x140] sm:$0xff]
    %v116 = vld [vmem:[#allocation5 + $0x148] sm:$0xff]
    %v117 = vld [vmem:[#allocation5 + $0x150] sm:$0xff]
    %v118 = vld [vmem:[#allocation5 + $0x158] sm:$0xff]
    %v119 = vld [vmem:[#allocation5 + $0x160] sm:$0xff]
    %v120 = vld [vmem:[#allocation5 + $0x168] sm:$0xff]
    %v121 = vld [vmem:[#allocation5 + $0x170] sm:$0xff]
    %v122 = vld [vmem:[#allocation5 + $0x178] sm:$0xff]
    %v123 = vld [vmem:[#allocation5 + $0x180] sm:$0xff]
    %v124 = vld [vmem:[#allocation5 + $0x188] sm:$0xff]
    %v125 = vld [vmem:[#allocation5 + $0x190] sm:$0xff]
    %v126 = vld [vmem:[#allocation5 + $0x198] sm:$0xff]
    %v127 = vld [vmem:[#allocation5 + $0x1a0] sm:$0xff]
    %v128 = vld [vmem:[#allocation5 + $0x1a8] sm:$0xff]
    %v129 = vld [vmem:[#allocation5 + $0x1b0] sm:$0xff]
    %v130 = vld [vmem:[#allocation5 + $0x1b8] sm:$0xff]
    %v131 = vld [vmem:[#allocation5 + $0x1c0] sm:$0xff]
    %v132 = vld [vmem:[#allocation5 + $0x1c8] sm:$0xff]
    %v133 = vld [vmem:[#allocation5 + $0x1d0] sm:$0xff]
    %v134 = vld [vmem:[#allocation5 + $0x1d8] sm:$0xff]
    %v135 = vld [vmem:[#allocation5 + $0x1e0] sm:$0xff]
    %v136 = vld [vmem:[#allocation5 + $0x1e8] sm:$0xff]
    %v137 = vld [vmem:[#allocation5 + $0x1f0] sm:$0xff]
    %v138 = vld [vmem:[#allocation5 + $0x1f8] sm:$0xff]
    %v139 = vld [vmem:[#allocation5 + $0x200] sm:$0xff]
    %v140 = vld [vmem:[#allocation5 + $0x208] sm:$0xff]
    %v141 = vld [vmem:[#allocation5 + $0x210] sm:$0xff]
    %v142 = vld [vmem:[#allocation5 + $0x218] sm:$0xff]
    %v143 = vld [vmem:[#allocation5 + $0x220] sm:$0xff]
    %v144 = vld [vmem:[#allocation5 + $0x228] sm:$0xff]
    %v145 = vld [vmem:[#allocation5 + $0x230] sm:$0xff]
    %v146 = vld [vmem:[#allocation5 + $0x238] sm:$0xff]
    %v147 = vld [vmem:[#allocation5 + $0x240] sm:$0xff]
    %v148 = vld [vmem:[#allocation5 + $0x248] sm:$0xff]
    %v149 = vld [vmem:[#allocation5 + $0x250] sm:$0xff]
    %v150 = vld [vmem:[#allocation5 + $0x258] sm:$0xff]
    %v151 = vld [vmem:[#allocation5 + $0x260] sm:$0xff]
    %v152 = vld [vmem:[#allocation5 + $0x268] sm:$0xff]
    %v153 = vld [vmem:[#allocation5 + $0x270] sm:$0xff]
    %v154 = vld [vmem:[#allocation5 + $0x278] sm:$0xff]
    %v155 = vld [vmem:[#allocation5 + $0x280] sm:$0xff]
    %v156 = vld [vmem:[#allocation5 + $0x288] sm:$0xff]
    %v157 = vld [vmem:[#allocation5 + $0x290] sm:$0xff]
    %v158 = vld [vmem:[#allocation5 + $0x298] sm:$0xff]
    %v159 = vld [vmem:[#allocation5 + $0x2a0] sm:$0xff]
    %v160 = vld [vmem:[#allocation5 + $0x2a8] sm:$0xff]
    %v161 = vld [vmem:[#allocation5 + $0x2b0] sm:$0xff]
    %v162 = vld [vmem:[#allocation5 + $0x2b8] sm:$0xff]
    %v163 = vld [vmem:[#allocation5 + $0x2c0] sm:$0xff]
    %v164 = vld [vmem:[#allocation5 + $0x2c8] sm:$0xff]
    %v165 = vld [vmem:[#allocation5 + $0x2d0] sm:$0xff]
    %v166 = vld [vmem:[#allocation5 + $0x2d8] sm:$0xff]
    %v167 = vld [vmem:[#allocation5 + $0x2e0] sm:$0xff]
    %v168 = vld [vmem:[#allocation5 + $0x2e8] sm:$0xff]
    %v169 = vld [vmem:[#allocation5 + $0x2f0] sm:$0xff]
    %v170 = vld [vmem:[#allocation5 + $0x2f8] sm:$0xff]
    %v171 = vld [vmem:[#allocation5 + $0x300] sm:$0xff]
    %v172 = vld [vmem:[#allocation5 + $0x308] sm:$0xff]
    %v173 = vld [vmem:[%s2] sm:$0x3]
    %v175 = vlaneseq
    %v176 = vshrl.u32 %v175, 7
    %v177 = vsub.s32 0, %v176
    %v178 = vrot.slane %v173, %v177
    %v179 = vlaneseq
    %v180 = vshrl.u32 %v179, 7
    %v181 = vsub.s32 1, %v180
    %v182 = vrot.slane %v173, %v181
    %v283 = vunpack.c.l.b16 %v75
    %v284 = vunpack.c.h.b16 %v75
    %v285 = vunpack.c.l.b16 %v76
    %v286 = vunpack.c.h.b16 %v76
    %v287 = vunpack.c.l.b16 %v77
    %v288 = vunpack.c.h.b16 %v77
    %v289 = vunpack.c.l.b16 %v78
    %v290 = vunpack.c.h.b16 %v78
    %v291 = vunpack.c.l.b16 %v79
    %v292 = vunpack.c.h.b16 %v79
    %v293 = vunpack.c.l.b16 %v80
    %v294 = vunpack.c.h.b16 %v80
    %v295 = vunpack.c.l.b16 %v81
    %v296 = vunpack.c.h.b16 %v81
    %v297 = vunpack.c.l.b16 %v82
    %v298 = vunpack.c.h.b16 %v82
    %v299 = vunpack.c.l.b16 %v83
    %v300 = vunpack.c.h.b16 %v83
    %v301 = vunpack.c.l.b16 %v84
    %v302 = vunpack.c.h.b16 %v84
    %v303 = vunpack.c.l.b16 %v85
    %v304 = vunpack.c.h.b16 %v85
    %v305 = vunpack.c.l.b16 %v86
    %v306 = vunpack.c.h.b16 %v86
    %v307 = vunpack.c.l.b16 %v87
    %v308 = vunpack.c.h.b16 %v87
    %v309 = vunpack.c.l.b16 %v88
    %v310 = vunpack.c.h.b16 %v88
    %v311 = vunpack.c.l.b16 %v89
    %v312 = vunpack.c.h.b16 %v89
    %v313 = vunpack.c.l.b16 %v90
    %v314 = vunpack.c.h.b16 %v90
    %v315 = vunpack.c.l.b16 %v91
    %v316 = vunpack.c.h.b16 %v91
    %v317 = vunpack.c.l.b16 %v92
    %v318 = vunpack.c.h.b16 %v92
    %v319 = vunpack.c.l.b16 %v93
    %v320 = vunpack.c.h.b16 %v93
    %v321 = vunpack.c.l.b16 %v94
    %v322 = vunpack.c.h.b16 %v94
    %v323 = vunpack.c.l.b16 %v95
    %v324 = vunpack.c.h.b16 %v95
    %v325 = vunpack.c.l.b16 %v96
    %v326 = vunpack.c.h.b16 %v96
    %v327 = vunpack.c.l.b16 %v97
    %v328 = vunpack.c.h.b16 %v97
    %v329 = vunpack.c.l.b16 %v98
    %v330 = vunpack.c.h.b16 %v98
    %v331 = vunpack.c.l.b16 %v99
    %v332 = vunpack.c.h.b16 %v99
    %v333 = vunpack.c.l.b16 %v100
    %v334 = vunpack.c.h.b16 %v100
    %v335 = vunpack.c.l.b16 %v101
    %v336 = vunpack.c.h.b16 %v101
    %v337 = vunpack.c.l.b16 %v102
    %v338 = vunpack.c.h.b16 %v102
    %v339 = vunpack.c.l.b16 %v103
    %v340 = vunpack.c.h.b16 %v103
    %v341 = vunpack.c.l.b16 %v104
    %v342 = vunpack.c.h.b16 %v104
    %v343 = vunpack.c.l.b16 %v105
    %v344 = vunpack.c.h.b16 %v105
    %v345 = vunpack.c.l.b16 %v106
    %v346 = vunpack.c.h.b16 %v106
    %v347 = vunpack.c.l.b16 %v107
    %v348 = vunpack.c.h.b16 %v107
    %v349 = vunpack.c.l.b16 %v108
    %v350 = vunpack.c.h.b16 %v108
    %v351 = vunpack.c.l.b16 %v109
    %v352 = vunpack.c.h.b16 %v109
    %v353 = vunpack.c.l.b16 %v110
    %v354 = vunpack.c.h.b16 %v110
    %v355 = vunpack.c.l.b16 %v111
    %v356 = vunpack.c.h.b16 %v111
    %v357 = vunpack.c.l.b16 %v112
    %v358 = vunpack.c.h.b16 %v112
    %v359 = vunpack.c.l.b16 %v113
    %v360 = vunpack.c.h.b16 %v113
    %v361 = vunpack.c.l.b16 %v114
    %v362 = vunpack.c.h.b16 %v114
    %v363 = vunpack.c.l.b16 %v115
    %v364 = vunpack.c.h.b16 %v115
    %v365 = vunpack.c.l.b16 %v116
    %v366 = vunpack.c.h.b16 %v116
    %v367 = vunpack.c.l.b16 %v117
    %v368 = vunpack.c.h.b16 %v117
    %v369 = vunpack.c.l.b16 %v118
    %v370 = vunpack.c.h.b16 %v118
    %v371 = vunpack.c.l.b16 %v119
    %v372 = vunpack.c.h.b16 %v119
    %v373 = vunpack.c.l.b16 %v120
    %v374 = vunpack.c.h.b16 %v120
    %v375 = vunpack.c.l.b16 %v121
    %v376 = vunpack.c.h.b16 %v121
    %v377 = vunpack.c.l.b16 %v122
    %v378 = vunpack.c.h.b16 %v122
    %v379 = vunpack.c.l.b16 %v123
    %v380 = vunpack.c.h.b16 %v123
    %v381 = vunpack.c.l.b16 %v124
    %v382 = vunpack.c.h.b16 %v124
    %v383 = vunpack.c.l.b16 %v125
    %v384 = vunpack.c.h.b16 %v125
    %v385 = vunpack.c.l.b16 %v126
    %v386 = vunpack.c.h.b16 %v126
    %v387 = vunpack.c.l.b16 %v127
    %v388 = vunpack.c.h.b16 %v127
    %v389 = vunpack.c.l.b16 %v128
    %v390 = vunpack.c.h.b16 %v128
    %v391 = vunpack.c.l.b16 %v129
    %v392 = vunpack.c.h.b16 %v129
    %v393 = vunpack.c.l.b16 %v130
    %v394 = vunpack.c.h.b16 %v130
    %v395 = vunpack.c.l.b16 %v131
    %v396 = vunpack.c.h.b16 %v131
    %v397 = vunpack.c.l.b16 %v132
    %v398 = vunpack.c.h.b16 %v132
    %v399 = vunpack.c.l.b16 %v133
    %v400 = vunpack.c.h.b16 %v133
    %v401 = vunpack.c.l.b16 %v134
    %v402 = vunpack.c.h.b16 %v134
    %v403 = vunpack.c.l.b16 %v135
    %v404 = vunpack.c.h.b16 %v135
    %v405 = vunpack.c.l.b16 %v136
    %v406 = vunpack.c.h.b16 %v136
    %v407 = vunpack.c.l.b16 %v137
    %v408 = vunpack.c.h.b16 %v137
    %v409 = vunpack.c.l.b16 %v138
    %v410 = vunpack.c.h.b16 %v138
    %v411 = vunpack.c.l.b16 %v139
    %v412 = vunpack.c.h.b16 %v139
    %v413 = vunpack.c.l.b16 %v140
    %v414 = vunpack.c.h.b16 %v140
    %v415 = vunpack.c.l.b16 %v141
    %v416 = vunpack.c.h.b16 %v141
    %v417 = vunpack.c.l.b16 %v142
    %v418 = vunpack.c.h.b16 %v142
    %v419 = vunpack.c.l.b16 %v143
    %v420 = vunpack.c.h.b16 %v143
    %v421 = vunpack.c.l.b16 %v144
    %v422 = vunpack.c.h.b16 %v144
    %v423 = vunpack.c.l.b16 %v145
    %v424 = vunpack.c.h.b16 %v145
    %v425 = vunpack.c.l.b16 %v146
    %v426 = vunpack.c.h.b16 %v146
    %v427 = vunpack.c.l.b16 %v147
    %v428 = vunpack.c.h.b16 %v147
    %v429 = vunpack.c.l.b16 %v148
    %v430 = vunpack.c.h.b16 %v148
    %v431 = vunpack.c.l.b16 %v149
    %v432 = vunpack.c.h.b16 %v149
    %v433 = vunpack.c.l.b16 %v150
    %v434 = vunpack.c.h.b16 %v150
    %v435 = vunpack.c.l.b16 %v151
    %v436 = vunpack.c.h.b16 %v151
    %v437 = vunpack.c.l.b16 %v152
    %v438 = vunpack.c.h.b16 %v152
    %v439 = vunpack.c.l.b16 %v153
    %v440 = vunpack.c.h.b16 %v153
    %v441 = vunpack.c.l.b16 %v154
    %v442 = vunpack.c.h.b16 %v154
    %v443 = vunpack.c.l.b16 %v155
    %v444 = vunpack.c.h.b16 %v155
    %v445 = vunpack.c.l.b16 %v156
    %v446 = vunpack.c.h.b16 %v156
    %v447 = vunpack.c.l.b16 %v157
    %v448 = vunpack.c.h.b16 %v157
    %v449 = vunpack.c.l.b16 %v158
    %v450 = vunpack.c.h.b16 %v158
    %v451 = vunpack.c.l.b16 %v159
    %v452 = vunpack.c.h.b16 %v159
    %v453 = vunpack.c.l.b16 %v160
    %v454 = vunpack.c.h.b16 %v160
    %v455 = vunpack.c.l.b16 %v161
    %v456 = vunpack.c.h.b16 %v161
    %v457 = vunpack.c.l.b16 %v162
    %v458 = vunpack.c.h.b16 %v162
    %v459 = vunpack.c.l.b16 %v163
    %v460 = vunpack.c.h.b16 %v163
    %v461 = vunpack.c.l.b16 %v164
    %v462 = vunpack.c.h.b16 %v164
    %v463 = vunpack.c.l.b16 %v165
    %v464 = vunpack.c.h.b16 %v165
    %v465 = vunpack.c.l.b16 %v166
    %v466 = vunpack.c.h.b16 %v166
    %v467 = vunpack.c.l.b16 %v167
    %v468 = vunpack.c.h.b16 %v167
    %v469 = vunpack.c.l.b16 %v168
    %v470 = vunpack.c.h.b16 %v168
    %v471 = vunpack.c.l.b16 %v169
    %v472 = vunpack.c.h.b16 %v169
    %v473 = vunpack.c.l.b16 %v170
    %v474 = vunpack.c.h.b16 %v170
    %v475 = vunpack.c.l.b16 %v171
    %v476 = vunpack.c.h.b16 %v171
    %v477 = vunpack.c.l.b16 %v172
    %v478 = vunpack.c.h.b16 %v172
    %v479 = vpack.c.b16 %v285, %v283
    %v480 = vpack.c.b16 %v286, %v284
    %v481 = vpack.c.b16 %v289, %v287
    %v482 = vpack.c.b16 %v290, %v288
    %v483 = vpack.c.b16 %v293, %v291
    %v484 = vpack.c.b16 %v294, %v292
    %v485 = vpack.c.b16 %v297, %v295
    %v486 = vpack.c.b16 %v298, %v296
    %v487 = vpack.c.b16 %v301, %v299
    %v488 = vpack.c.b16 %v302, %v300
    %v489 = vpack.c.b16 %v305, %v303
    %v490 = vpack.c.b16 %v306, %v304
    %v491 = vpack.c.b16 %v309, %v307
    %v492 = vpack.c.b16 %v310, %v308
    %v493 = vpack.c.b16 %v313, %v311
    %v494 = vpack.c.b16 %v314, %v312
    %v495 = vpack.c.b16 %v317, %v315
    %v496 = vpack.c.b16 %v318, %v316
    %v497 = vpack.c.b16 %v321, %v319
    %v498 = vpack.c.b16 %v322, %v320
    %v499 = vpack.c.b16 %v325, %v323
    %v500 = vpack.c.b16 %v326, %v324
    %v501 = vpack.c.b16 %v329, %v327
    %v502 = vpack.c.b16 %v330, %v328
    %v503 = vpack.c.b16 %v333, %v331
    %v504 = vpack.c.b16 %v334, %v332
    %v505 = vpack.c.b16 %v337, %v335
    %v506 = vpack.c.b16 %v338, %v336
    %v507 = vpack.c.b16 %v341, %v339
    %v508 = vpack.c.b16 %v342, %v340
    %v509 = vpack.c.b16 %v345, %v343
    %v510 = vpack.c.b16 %v346, %v344
    %v511 = vpack.c.b16 %v349, %v347
    %v512 = vpack.c.b16 %v350, %v348
    %v513 = vpack.c.b16 %v353, %v351
    %v514 = vpack.c.b16 %v354, %v352
    %v515 = vpack.c.b16 %v357, %v355
    %v516 = vpack.c.b16 %v358, %v356
    %v517 = vpack.c.b16 %v361, %v359
    %v518 = vpack.c.b16 %v362, %v360
    %v519 = vpack.c.b16 %v365, %v363
    %v520 = vpack.c.b16 %v366, %v364
    %v521 = vpack.c.b16 %v369, %v367
    %v522 = vpack.c.b16 %v370, %v368
    %v523 = vpack.c.b16 %v373, %v371
    %v524 = vpack.c.b16 %v374, %v372
    %v525 = vpack.c.b16 %v377, %v375
    %v526 = vpack.c.b16 %v378, %v376
    %v527 = vpack.c.b16 %v381, %v379
    %v528 = vpack.c.b16 %v382, %v380
    %v529 = vpack.c.b16 %v385, %v383
    %v530 = vpack.c.b16 %v386, %v384
    %v531 = vpack.c.b16 %v389, %v387
    %v532 = vpack.c.b16 %v390, %v388
    %v533 = vpack.c.b16 %v393, %v391
    %v534 = vpack.c.b16 %v394, %v392
    %v535 = vpack.c.b16 %v397, %v395
    %v536 = vpack.c.b16 %v398, %v396
    %v537 = vpack.c.b16 %v401, %v399
    %v538 = vpack.c.b16 %v402, %v400
    %v539 = vpack.c.b16 %v405, %v403
    %v540 = vpack.c.b16 %v406, %v404
    %v541 = vpack.c.b16 %v409, %v407
    %v542 = vpack.c.b16 %v410, %v408
    %v543 = vpack.c.b16 %v413, %v411
    %v544 = vpack.c.b16 %v414, %v412
    %v545 = vpack.c.b16 %v417, %v415
    %v546 = vpack.c.b16 %v418, %v416
    %v547 = vpack.c.b16 %v421, %v419
    %v548 = vpack.c.b16 %v422, %v420
    %v549 = vpack.c.b16 %v425, %v423
    %v550 = vpack.c.b16 %v426, %v424
    %v551 = vpack.c.b16 %v429, %v427
    %v552 = vpack.c.b16 %v430, %v428
    %v553 = vpack.c.b16 %v433, %v431
    %v554 = vpack.c.b16 %v434, %v432
    %v555 = vpack.c.b16 %v437, %v435
    %v556 = vpack.c.b16 %v438, %v436
    %v557 = vpack.c.b16 %v441, %v439
    %v558 = vpack.c.b16 %v442, %v440
    %v559 = vpack.c.b16 %v445, %v443
    %v560 = vpack.c.b16 %v446, %v444
    %v561 = vpack.c.b16 %v449, %v447
    %v562 = vpack.c.b16 %v450, %v448
    %v563 = vpack.c.b16 %v453, %v451
    %v564 = vpack.c.b16 %v454, %v452
    %v565 = vpack.c.b16 %v457, %v455
    %v566 = vpack.c.b16 %v458, %v456
    %v567 = vpack.c.b16 %v461, %v459
    %v568 = vpack.c.b16 %v462, %v460
    %v569 = vpack.c.b16 %v465, %v463
    %v570 = vpack.c.b16 %v466, %v464
    %v571 = vpack.c.b16 %v469, %v467
    %v572 = vpack.c.b16 %v470, %v468
    %v573 = vpack.c.b16 %v473, %v471
    %v574 = vpack.c.b16 %v474, %v472
    %v575 = vpack.c.b16 %v477, %v475
    %v576 = vpack.c.b16 %v478, %v476
    %vm675 = vcmask 130048
    %v677 = vsel %vm675, %v74, 0
    %679 = vmatprep.subr.bf16.mxu0 %v494
    %680 = vmatpush1.bf16.msra.mxu0 %v493
    %681 = vmatprep.subr.bf16.mxu0 %v492
    %682 = vmatpush1.bf16.msra.mxu0 %v491
    %683 = vmatprep.subr.bf16.mxu0 %v490
    %684 = vmatpush1.bf16.msra.mxu0 %v489
    %685 = vmatprep.subr.bf16.mxu0 %v488
    %686 = vmatpush1.bf16.msra.mxu0 %v487
    %687 = vmatprep.subr.bf16.mxu0 %v486
    %688 = vmatpush1.bf16.msra.mxu0 %v485
    %689 = vmatprep.subr.bf16.mxu0 %v484
    %690 = vmatpush1.bf16.msra.mxu0 %v483
    %691 = vmatprep.subr.bf16.mxu0 %v482
    %692 = vmatpush1.bf16.msra.mxu0 %v481
    %693 = vmatprep.subr.bf16.mxu0 %v480
    %694 = vmatpush1.bf16.msra.mxu0 %v479
    %695 = vmatprep.subr.bf16.mxu0 %v510
    %696 = vmatpush2.bf16.msra.mxu0 %v509
    %697 = vmatprep.subr.bf16.mxu0 %v508
    %698 = vmatpush2.bf16.msra.mxu0 %v507
    %699 = vmatprep.subr.bf16.mxu0 %v506
    %700 = vmatpush2.bf16.msra.mxu0 %v505
    %701 = vmatprep.subr.bf16.mxu0 %v504
    %702 = vmatpush2.bf16.msra.mxu0 %v503
    %703 = vmatprep.subr.bf16.mxu0 %v502
    %704 = vmatpush2.bf16.msra.mxu0 %v501
    %705 = vmatprep.subr.bf16.mxu0 %v500
    %706 = vmatpush2.bf16.msra.mxu0 %v499
    %707 = vmatprep.subr.bf16.mxu0 %v498
    %708 = vmatpush2.bf16.msra.mxu0 %v497
    %709 = vmatprep.subr.bf16.mxu0 %v496
    %710 = vmatpush2.bf16.msra.mxu0 %v495
    %711 = vmatprep.mubr.bf16.mxu0 %v69
    %712 = vmatmul.mubr.bf16.gmra.mxu0 %v68
    %v713 = vpop.f32.mrf.mxu0
    %v714 = vadd.f32 %v178, %v713
    %v715 = vpop.f32.mrf.mxu0
    %v716 = vadd.f32 %v182, %v715
    %v717 = vpop.f32.mrf.mxu0
    %v718 = vpop.f32.mrf.mxu0
    %719 = vdwg.mxu0
    %720 = vmatprep.subr.bf16.mxu0 %v526
    %721 = vmatpush1.bf16.msra.mxu0 %v525
    %722 = vmatprep.subr.bf16.mxu0 %v524
    %723 = vmatpush1.bf16.msra.mxu0 %v523
    %724 = vmatprep.subr.bf16.mxu0 %v522
    %725 = vmatpush1.bf16.msra.mxu0 %v521
    %726 = vmatprep.subr.bf16.mxu0 %v520
    %727 = vmatpush1.bf16.msra.mxu0 %v519
    %728 = vmatprep.subr.bf16.mxu0 %v518
    %729 = vmatpush1.bf16.msra.mxu0 %v517
    %730 = vmatprep.subr.bf16.mxu0 %v516
    %731 = vmatpush1.bf16.msra.mxu0 %v515
    %732 = vmatprep.subr.bf16.mxu0 %v514
    %733 = vmatpush1.bf16.msra.mxu0 %v513
    %734 = vmatprep.subr.bf16.mxu0 %v512
    %735 = vmatpush1.bf16.msra.mxu0 %v511
    %736 = vmatprep.subr.bf16.mxu0 %v542
    %737 = vmatpush2.bf16.msra.mxu0 %v541
    %738 = vmatprep.subr.bf16.mxu0 %v540
    %739 = vmatpush2.bf16.msra.mxu0 %v539
    %740 = vmatprep.subr.bf16.mxu0 %v538
    %741 = vmatpush2.bf16.msra.mxu0 %v537
    %742 = vmatprep.subr.bf16.mxu0 %v536
    %743 = vmatpush2.bf16.msra.mxu0 %v535
    %744 = vmatprep.subr.bf16.mxu0 %v534
    %745 = vmatpush2.bf16.msra.mxu0 %v533
    %746 = vmatprep.subr.bf16.mxu0 %v532
    %747 = vmatpush2.bf16.msra.mxu0 %v531
    %748 = vmatprep.subr.bf16.mxu0 %v530
    %749 = vmatpush2.bf16.msra.mxu0 %v529
    %750 = vmatprep.subr.bf16.mxu0 %v528
    %751 = vmatpush2.bf16.msra.mxu0 %v527
    %752 = vmatprep.mubr.bf16.mxu0 %v71
    %753 = vmatmul.mubr.bf16.gmra.mxu0 %v70
    %v754 = vpop.f32.mrf.mxu0
    %v755 = vadd.f32 %v714, %v754
    %v756 = vpop.f32.mrf.mxu0
    %v757 = vadd.f32 %v716, %v756
    %v758 = vpop.f32.mrf.mxu0
    %v759 = vpop.f32.mrf.mxu0
    %760 = vdwg.mxu0
    %761 = vmatprep.subr.bf16.mxu0 %v558
    %762 = vmatpush1.bf16.msra.mxu0 %v557
    %763 = vmatprep.subr.bf16.mxu0 %v556
    %764 = vmatpush1.bf16.msra.mxu0 %v555
    %765 = vmatprep.subr.bf16.mxu0 %v554
    %766 = vmatpush1.bf16.msra.mxu0 %v553
    %767 = vmatprep.subr.bf16.mxu0 %v552
    %768 = vmatpush1.bf16.msra.mxu0 %v551
    %769 = vmatprep.subr.bf16.mxu0 %v550
    %770 = vmatpush1.bf16.msra.mxu0 %v549
    %771 = vmatprep.subr.bf16.mxu0 %v548
    %772 = vmatpush1.bf16.msra.mxu0 %v547
    %773 = vmatprep.subr.bf16.mxu0 %v546
    %774 = vmatpush1.bf16.msra.mxu0 %v545
    %775 = vmatprep.subr.bf16.mxu0 %v544
    %776 = vmatpush1.bf16.msra.mxu0 %v543
    %777 = vmatprep.subr.bf16.mxu0 %v574
    %778 = vmatpush2.bf16.msra.mxu0 %v573
    %779 = vmatprep.subr.bf16.mxu0 %v572
    %780 = vmatpush2.bf16.msra.mxu0 %v571
    %781 = vmatprep.subr.bf16.mxu0 %v570
    %782 = vmatpush2.bf16.msra.mxu0 %v569
    %783 = vmatprep.subr.bf16.mxu0 %v568
    %784 = vmatpush2.bf16.msra.mxu0 %v567
    %785 = vmatprep.subr.bf16.mxu0 %v566
    %786 = vmatpush2.bf16.msra.mxu0 %v565
    %787 = vmatprep.subr.bf16.mxu0 %v564
    %788 = vmatpush2.bf16.msra.mxu0 %v563
    %789 = vmatprep.subr.bf16.mxu0 %v562
    %790 = vmatpush2.bf16.msra.mxu0 %v561
    %791 = vmatprep.subr.bf16.mxu0 %v560
    %792 = vmatpush2.bf16.msra.mxu0 %v559
    %793 = vmatprep.mubr.bf16.mxu0 %v73
    %794 = vmatmul.mubr.bf16.gmra.mxu0 %v72
    %v795 = vpop.f32.mrf.mxu0
    %v796 = vadd.f32 %v755, %v795
    %v797 = vpop.f32.mrf.mxu0
    %v798 = vadd.f32 %v757, %v797
    %v799 = vpop.f32.mrf.mxu0
    %v800 = vpop.f32.mrf.mxu0
    %801 = vdwg.mxu0
    %802 = vmatprep.subr.bf16.mxu0 0
    %803 = vmatpush1.bf16.msra.mxu0 0
    %804 = vmatprep.subr.bf16.mxu0 0
    %805 = vmatpush1.bf16.msra.mxu0 0
    %806 = vmatprep.subr.bf16.mxu0 0
    %807 = vmatpush1.bf16.msra.mxu0 0
    %808 = vmatprep.subr.bf16.mxu0 0
    %809 = vmatpush1.bf16.msra.mxu0 0
    %810 = vmatprep.subr.bf16.mxu0 0
    %811 = vmatpush1.bf16.msra.mxu0 0
    %812 = vmatprep.subr.bf16.mxu0 0
    %813 = vmatpush1.bf16.msra.mxu0 0
    %814 = vmatprep.subr.bf16.mxu0 0
    %815 = vmatpush1.bf16.msra.mxu0 0
    %816 = vmatprep.subr.bf16.mxu0 %v576
    %817 = vmatpush1.bf16.msra.mxu0 %v575
    %818 = vmatprep.subr.bf16.mxu0 0
    %819 = vmatpush2.bf16.msra.mxu0 0
    %820 = vmatprep.subr.bf16.mxu0 0
    %821 = vmatpush2.bf16.msra.mxu0 0
    %822 = vmatprep.subr.bf16.mxu0 0
    %823 = vmatpush2.bf16.msra.mxu0 0
    %824 = vmatprep.subr.bf16.mxu0 0
    %825 = vmatpush2.bf16.msra.mxu0 0
    %826 = vmatprep.subr.bf16.mxu0 0
    %827 = vmatpush2.bf16.msra.mxu0 0
    %828 = vmatprep.subr.bf16.mxu0 0
    %829 = vmatpush2.bf16.msra.mxu0 0
    %830 = vmatprep.subr.bf16.mxu0 0
    %831 = vmatpush2.bf16.msra.mxu0 0
    %832 = vmatprep.subr.bf16.mxu0 0
    %833 = vmatpush2.bf16.msra.mxu0 0
    %834 = vmatprep.mubr.bf16.mxu0 0
    %835 = vmatmul.mubr.bf16.gmra.mxu0 %v677
    %v836 = vpop.f32.mrf.mxu0
    %v837 = vadd.f32 %v796, %v836
    %v838 = vpop.f32.mrf.mxu0
    %v839 = vadd.f32 %v798, %v838
    %v840 = vpop.f32.mrf.mxu0
    %v841 = vpop.f32.mrf.mxu0
    %842 = vdwg.mxu0
    %v843 = vtanh.pop %v837
    %v844 = vtanh.pop %v839
    %v845 = vpack.c.bf16 %v843, %v843
    %v846 = vpack.c.bf16 %v844, %v844
    %v847 = vld [vmem:[#allocation7] sm:$0xff]
    %v848 = vld [vmem:[#allocation7 + $0x8] sm:$0xf]
    %v849 = vld [vmem:[#allocation7 + $0xc] sm:$0xff]
    %v850 = vld [vmem:[#allocation7 + $0x14] sm:$0xf]
    %v851 = vld [vmem:[#allocation7 + $0x18] sm:$0xff]
    %v852 = vld [vmem:[#allocation7 + $0x20] sm:$0xf]
    %v853 = vld [vmem:[#allocation7 + $0x24] sm:$0xff]
    %v854 = vld [vmem:[#allocation7 + $0x2c] sm:$0xf]
    %v855 = vld [vmem:[#allocation7 + $0x30] sm:$0xff]
    %v856 = vld [vmem:[#allocation7 + $0x38] sm:$0xf]
    %v857 = vld [vmem:[#allocation7 + $0x3c] sm:$0xff]
    %v858 = vld [vmem:[#allocation7 + $0x44] sm:$0xf]
    %v859 = vld [vmem:[#allocation7 + $0x48] sm:$0xff]
    %v860 = vld [vmem:[#allocation7 + $0x50] sm:$0xf]
    %v861 = vld [vmem:[#allocation7 + $0x54] sm:$0xff]
    %v862 = vld [vmem:[#allocation7 + $0x5c] sm:$0xf]
    %v863 = vld [vmem:[#allocation7 + $0x60] sm:$0xff]
    %v864 = vld [vmem:[#allocation7 + $0x68] sm:$0xf]
    %v865 = vld [vmem:[#allocation7 + $0x6c] sm:$0xff]
    %v866 = vld [vmem:[#allocation7 + $0x74] sm:$0xf]
    %v867 = vld [vmem:[#allocation7 + $0x78] sm:$0xff]
    %v868 = vld [vmem:[#allocation7 + $0x80] sm:$0xf]
    %v869 = vld [vmem:[#allocation7 + $0x84] sm:$0xff]
    %v870 = vld [vmem:[#allocation7 + $0x8c] sm:$0xf]
    %v871 = vld [vmem:[#allocation7 + $0x90] sm:$0xff]
    %v872 = vld [vmem:[#allocation7 + $0x98] sm:$0xf]
    %v873 = vld [vmem:[#allocation7 + $0x9c] sm:$0xff]
    %v874 = vld [vmem:[#allocation7 + $0xa4] sm:$0xf]
    %v875 = vld [vmem:[#allocation7 + $0xa8] sm:$0xff]
    %v876 = vld [vmem:[#allocation7 + $0xb0] sm:$0xf]
    %v877 = vld [vmem:[#allocation7 + $0xb4] sm:$0xff]
    %v878 = vld [vmem:[#allocation7 + $0xbc] sm:$0xf]
    %v879 = vld [vmem:[#allocation7 + $0xc0] sm:$0xff]
    %v880 = vld [vmem:[#allocation7 + $0xc8] sm:$0xf]
    %v881 = vld [vmem:[#allocation7 + $0xcc] sm:$0xff]
    %v882 = vld [vmem:[#allocation7 + $0xd4] sm:$0xf]
    %v883 = vld [vmem:[#allocation7 + $0xd8] sm:$0xff]
    %v884 = vld [vmem:[#allocation7 + $0xe0] sm:$0xf]
    %v885 = vld [vmem:[#allocation7 + $0xe4] sm:$0xff]
    %v886 = vld [vmem:[#allocation7 + $0xec] sm:$0xf]
    %v887 = vld [vmem:[#allocation7 + $0xf0] sm:$0xff]
    %v888 = vld [vmem:[#allocation7 + $0xf8] sm:$0xf]
    %v889 = vld [vmem:[#allocation7 + $0xfc] sm:$0xff]
    %v890 = vld [vmem:[#allocation7 + $0x104] sm:$0xf]
    %v891 = vld [vmem:[#allocation7 + $0x108] sm:$0xff]
    %v892 = vld [vmem:[#allocation7 + $0x110] sm:$0xf]
    %v893 = vld [vmem:[#allocation7 + $0x114] sm:$0xff]
    %v894 = vld [vmem:[#allocation7 + $0x11c] sm:$0xf]
    %v895 = vld [vmem:[#allocation7 + $0x120] sm:$0xff]
    %v896 = vld [vmem:[#allocation7 + $0x128] sm:$0xf]
    %v897 = vld [vmem:[#allocation7 + $0x12c] sm:$0xff]
    %v898 = vld [vmem:[#allocation7 + $0x134] sm:$0xf]
    %v899 = vld [vmem:[#allocation7 + $0x138] sm:$0xff]
    %v900 = vld [vmem:[#allocation7 + $0x140] sm:$0xf]
    %v901 = vld [vmem:[#allocation7 + $0x144] sm:$0xff]
    %v902 = vld [vmem:[#allocation7 + $0x14c] sm:$0xf]
    %v903 = vld [vmem:[#allocation7 + $0x150] sm:$0xff]
    %v904 = vld [vmem:[#allocation7 + $0x158] sm:$0xf]
    %v905 = vld [vmem:[#allocation7 + $0x15c] sm:$0xff]
    %v906 = vld [vmem:[#allocation7 + $0x164] sm:$0xf]
    %v907 = vld [vmem:[#allocation7 + $0x168] sm:$0xff]
    %v908 = vld [vmem:[#allocation7 + $0x170] sm:$0xf]
    %v909 = vld [vmem:[#allocation7 + $0x174] sm:$0xff]
    %v910 = vld [vmem:[#allocation7 + $0x17c] sm:$0xf]
    %v911 = vld [vmem:[%s4] sm:$0x7]
    %v913 = vlaneseq
    %v914 = vshrl.u32 %v913, 7
    %v915 = vsub.s32 0, %v914
    %v916 = vrot.slane %v911, %v915
    %v917 = vlaneseq
    %v918 = vshrl.u32 %v917, 7
    %v919 = vsub.s32 1, %v918
    %v920 = vrot.slane %v911, %v919
    %v921 = vlaneseq
    %v922 = vshrl.u32 %v921, 7
    %v923 = vsub.s32 2, %v922
    %v924 = vrot.slane %v911, %v923
    %v992 = vunpack.c.l.b16 %v847
    %v993 = vunpack.c.h.b16 %v847
    %v994 = vunpack.c.l.b16 %v848
    %v995 = vunpack.c.l.b16 %v849
    %v996 = vunpack.c.h.b16 %v849
    %v997 = vunpack.c.l.b16 %v850
    %v998 = vunpack.c.l.b16 %v851
    %v999 = vunpack.c.h.b16 %v851
    %v1000 = vunpack.c.l.b16 %v852
    %v1001 = vunpack.c.l.b16 %v853
    %v1002 = vunpack.c.h.b16 %v853
    %v1003 = vunpack.c.l.b16 %v854
    %v1004 = vunpack.c.l.b16 %v855
    %v1005 = vunpack.c.h.b16 %v855
    %v1006 = vunpack.c.l.b16 %v856
    %v1007 = vunpack.c.l.b16 %v857
    %v1008 = vunpack.c.h.b16 %v857
    %v1009 = vunpack.c.l.b16 %v858
    %v1010 = vunpack.c.l.b16 %v859
    %v1011 = vunpack.c.h.b16 %v859
    %v1012 = vunpack.c.l.b16 %v860
    %v1013 = vunpack.c.l.b16 %v861
    %v1014 = vunpack.c.h.b16 %v861
    %v1015 = vunpack.c.l.b16 %v862
    %v1016 = vunpack.c.l.b16 %v863
    %v1017 = vunpack.c.h.b16 %v863
    %v1018 = vunpack.c.l.b16 %v864
    %v1019 = vunpack.c.l.b16 %v865
    %v1020 = vunpack.c.h.b16 %v865
    %v1021 = vunpack.c.l.b16 %v866
    %v1022 = vunpack.c.l.b16 %v867
    %v1023 = vunpack.c.h.b16 %v867
    %v1024 = vunpack.c.l.b16 %v868
    %v1025 = vunpack.c.l.b16 %v869
    %v1026 = vunpack.c.h.b16 %v869
    %v1027 = vunpack.c.l.b16 %v870
    %v1028 = vunpack.c.l.b16 %v871
    %v1029 = vunpack.c.h.b16 %v871
    %v1030 = vunpack.c.l.b16 %v872
    %v1031 = vunpack.c.l.b16 %v873
    %v1032 = vunpack.c.h.b16 %v873
    %v1033 = vunpack.c.l.b16 %v874
    %v1034 = vunpack.c.l.b16 %v875
    %v1035 = vunpack.c.h.b16 %v875
    %v1036 = vunpack.c.l.b16 %v876
    %v1037 = vunpack.c.l.b16 %v877
    %v1038 = vunpack.c.h.b16 %v877
    %v1039 = vunpack.c.l.b16 %v878
    %v1040 = vunpack.c.l.b16 %v879
    %v1041 = vunpack.c.h.b16 %v879
    %v1042 = vunpack.c.l.b16 %v880
    %v1043 = vunpack.c.l.b16 %v881
    %v1044 = vunpack.c.h.b16 %v881
    %v1045 = vunpack.c.l.b16 %v882
    %v1046 = vunpack.c.l.b16 %v883
    %v1047 = vunpack.c.h.b16 %v883
    %v1048 = vunpack.c.l.b16 %v884
    %v1049 = vunpack.c.l.b16 %v885
    %v1050 = vunpack.c.h.b16 %v885
    %v1051 = vunpack.c.l.b16 %v886
    %v1052 = vunpack.c.l.b16 %v887
    %v1053 = vunpack.c.h.b16 %v887
    %v1054 = vunpack.c.l.b16 %v888
    %v1055 = vunpack.c.l.b16 %v889
    %v1056 = vunpack.c.h.b16 %v889
    %v1057 = vunpack.c.l.b16 %v890
    %v1058 = vunpack.c.l.b16 %v891
    %v1059 = vunpack.c.h.b16 %v891
    %v1060 = vunpack.c.l.b16 %v892
    %v1061 = vunpack.c.l.b16 %v893
    %v1062 = vunpack.c.h.b16 %v893
    %v1063 = vunpack.c.l.b16 %v894
    %v1064 = vunpack.c.l.b16 %v895
    %v1065 = vunpack.c.h.b16 %v895
    %v1066 = vunpack.c.l.b16 %v896
    %v1067 = vunpack.c.l.b16 %v897
    %v1068 = vunpack.c.h.b16 %v897
    %v1069 = vunpack.c.l.b16 %v898
    %v1070 = vunpack.c.l.b16 %v899
    %v1071 = vunpack.c.h.b16 %v899
    %v1072 = vunpack.c.l.b16 %v900
    %v1073 = vunpack.c.l.b16 %v901
    %v1074 = vunpack.c.h.b16 %v901
    %v1075 = vunpack.c.l.b16 %v902
    %v1076 = vunpack.c.l.b16 %v903
    %v1077 = vunpack.c.h.b16 %v903
    %v1078 = vunpack.c.l.b16 %v904
    %v1079 = vunpack.c.l.b16 %v905
    %v1080 = vunpack.c.h.b16 %v905
    %v1081 = vunpack.c.l.b16 %v906
    %v1082 = vunpack.c.l.b16 %v907
    %v1083 = vunpack.c.h.b16 %v907
    %v1084 = vunpack.c.l.b16 %v908
    %v1085 = vunpack.c.l.b16 %v909
    %v1086 = vunpack.c.h.b16 %v909
    %v1087 = vunpack.c.l.b16 %v910
    %v1088 = vpack.c.b16 %v995, %v992
    %v1089 = vpack.c.b16 %v996, %v993
    %v1090 = vpack.c.b16 %v997, %v994
    %v1091 = vpack.c.b16 %v1001, %v998
    %v1092 = vpack.c.b16 %v1002, %v999
    %v1093 = vpack.c.b16 %v1003, %v1000
    %v1094 = vpack.c.b16 %v1007, %v1004
    %v1095 = vpack.c.b16 %v1008, %v1005
    %v1096 = vpack.c.b16 %v1009, %v1006
    %v1097 = vpack.c.b16 %v1013, %v1010
    %v1098 = vpack.c.b16 %v1014, %v1011
    %v1099 = vpack.c.b16 %v1015, %v1012
    %v1100 = vpack.c.b16 %v1019, %v1016
    %v1101 = vpack.c.b16 %v1020, %v1017
    %v1102 = vpack.c.b16 %v1021, %v1018
    %v1103 = vpack.c.b16 %v1025, %v1022
    %v1104 = vpack.c.b16 %v1026, %v1023
    %v1105 = vpack.c.b16 %v1027, %v1024
    %v1106 = vpack.c.b16 %v1031, %v1028
    %v1107 = vpack.c.b16 %v1032, %v1029
    %v1108 = vpack.c.b16 %v1033, %v1030
    %v1109 = vpack.c.b16 %v1037, %v1034
    %v1110 = vpack.c.b16 %v1038, %v1035
    %v1111 = vpack.c.b16 %v1039, %v1036
    %v1112 = vpack.c.b16 %v1043, %v1040
    %v1113 = vpack.c.b16 %v1044, %v1041
    %v1114 = vpack.c.b16 %v1045, %v1042
    %v1115 = vpack.c.b16 %v1049, %v1046
    %v1116 = vpack.c.b16 %v1050, %v1047
    %v1117 = vpack.c.b16 %v1051, %v1048
    %v1118 = vpack.c.b16 %v1055, %v1052
    %v1119 = vpack.c.b16 %v1056, %v1053
    %v1120 = vpack.c.b16 %v1057, %v1054
    %v1121 = vpack.c.b16 %v1061, %v1058
    %v1122 = vpack.c.b16 %v1062, %v1059
    %v1123 = vpack.c.b16 %v1063, %v1060
    %v1124 = vpack.c.b16 %v1067, %v1064
    %v1125 = vpack.c.b16 %v1068, %v1065
    %v1126 = vpack.c.b16 %v1069, %v1066
    %v1127 = vpack.c.b16 %v1073, %v1070
    %v1128 = vpack.c.b16 %v1074, %v1071
    %v1129 = vpack.c.b16 %v1075, %v1072
    %v1130 = vpack.c.b16 %v1079, %v1076
    %v1131 = vpack.c.b16 %v1080, %v1077
    %v1132 = vpack.c.b16 %v1081, %v1078
    %v1133 = vpack.c.b16 %v1085, %v1082
    %v1134 = vpack.c.b16 %v1086, %v1083
    %v1135 = vpack.c.b16 %v1087, %v1084
    %1184 = vmatprep.subr.bf16.mxu0 %v1110
    %1185 = vmatpush1.bf16.msra.mxu0 %v1109
    %1186 = vmatprep.subr.bf16.mxu0 %v1107
    %1187 = vmatpush1.bf16.msra.mxu0 %v1106
    %1188 = vmatprep.subr.bf16.mxu0 %v1104
    %1189 = vmatpush1.bf16.msra.mxu0 %v1103
    %1190 = vmatprep.subr.bf16.mxu0 %v1101
    %1191 = vmatpush1.bf16.msra.mxu0 %v1100
    %1192 = vmatprep.subr.bf16.mxu0 %v1098
    %1193 = vmatpush1.bf16.msra.mxu0 %v1097
    %1194 = vmatprep.subr.bf16.mxu0 %v1095
    %1195 = vmatpush1.bf16.msra.mxu0 %v1094
    %1196 = vmatprep.subr.bf16.mxu0 %v1092
    %1197 = vmatpush1.bf16.msra.mxu0 %v1091
    %1198 = vmatprep.subr.bf16.mxu0 %v1089
    %1199 = vmatpush1.bf16.msra.mxu0 %v1088
    %1200 = vmatprep.subr.bf16.mxu0 %v1134
    %1201 = vmatpush2.bf16.msra.mxu0 %v1133
    %1202 = vmatprep.subr.bf16.mxu0 %v1131
    %1203 = vmatpush2.bf16.msra.mxu0 %v1130
    %1204 = vmatprep.subr.bf16.mxu0 %v1128
    %1205 = vmatpush2.bf16.msra.mxu0 %v1127
    %1206 = vmatprep.subr.bf16.mxu0 %v1125
    %1207 = vmatpush2.bf16.msra.mxu0 %v1124
    %1208 = vmatprep.subr.bf16.mxu0 %v1122
    %1209 = vmatpush2.bf16.msra.mxu0 %v1121
    %1210 = vmatprep.subr.bf16.mxu0 %v1119
    %1211 = vmatpush2.bf16.msra.mxu0 %v1118
    %1212 = vmatprep.subr.bf16.mxu0 %v1116
    %1213 = vmatpush2.bf16.msra.mxu0 %v1115
    %1214 = vmatprep.subr.bf16.mxu0 %v1113
    %1215 = vmatpush2.bf16.msra.mxu0 %v1112
    %1216 = vmatprep.mubr.bf16.mxu0 %v846
    %1217 = vmatmul.mubr.bf16.gmra.mxu0 %v845
    %v1218 = vpop.f32.mrf.mxu0
    %v1219 = vadd.f32 %v916, %v1218
    %v1220 = vpop.f32.mrf.mxu0
    %v1221 = vadd.f32 %v920, %v1220
    %v1222 = vpop.f32.mrf.mxu0
    %v1223 = vpop.f32.mrf.mxu0
    %1224 = vdwg.mxu0
    %1225 = vmatprep.subr.bf16.mxu0 0
    %1226 = vmatpush1.bf16.msra.mxu0 %v1111
    %1227 = vmatprep.subr.bf16.mxu0 0
    %1228 = vmatpush1.bf16.msra.mxu0 %v1108
    %1229 = vmatprep.subr.bf16.mxu0 0
    %1230 = vmatpush1.bf16.msra.mxu0 %v1105
    %1231 = vmatprep.subr.bf16.mxu0 0
    %1232 = vmatpush1.bf16.msra.mxu0 %v1102
    %1233 = vmatprep.subr.bf16.mxu0 0
    %1234 = vmatpush1.bf16.msra.mxu0 %v1099
    %1235 = vmatprep.subr.bf16.mxu0 0
    %1236 = vmatpush1.bf16.msra.mxu0 %v1096
    %1237 = vmatprep.subr.bf16.mxu0 0
    %1238 = vmatpush1.bf16.msra.mxu0 %v1093
    %1239 = vmatprep.subr.bf16.mxu0 0
    %1240 = vmatpush1.bf16.msra.mxu0 %v1090
    %1241 = vmatprep.subr.bf16.mxu0 0
    %1242 = vmatpush2.bf16.msra.mxu0 %v1135
    %1243 = vmatprep.subr.bf16.mxu0 0
    %1244 = vmatpush2.bf16.msra.mxu0 %v1132
    %1245 = vmatprep.subr.bf16.mxu0 0
    %1246 = vmatpush2.bf16.msra.mxu0 %v1129
    %1247 = vmatprep.subr.bf16.mxu0 0
    %1248 = vmatpush2.bf16.msra.mxu0 %v1126
    %1249 = vmatprep.subr.bf16.mxu0 0
    %1250 = vmatpush2.bf16.msra.mxu0 %v1123
    %1251 = vmatprep.subr.bf16.mxu0 0
    %1252 = vmatpush2.bf16.msra.mxu0 %v1120
    %1253 = vmatprep.subr.bf16.mxu0 0
    %1254 = vmatpush2.bf16.msra.mxu0 %v1117
    %1255 = vmatprep.subr.bf16.mxu0 0
    %1256 = vmatpush2.bf16.msra.mxu0 %v1114
    %1257 = vmatprep.mubr.bf16.mxu0 %v846
    %1258 = vmatmul.mubr.bf16.gmra.mxu0 %v845
    %v1259 = vpop.f32.mrf.mxu0
    %v1260 = vadd.f32 %v924, %v1259
    %v1261 = vpop.f32.mrf.mxu0
    %v1262 = vpop.f32.mrf.mxu0
    %v1263 = vpop.f32.mrf.mxu0
    %1264 = vdwg.mxu0
    %1265 = vst [vmem:[#allocation8] sm:$0xff] %v1219
    %1266 = vst [vmem:[#allocation8 + $0x8] sm:$0xff] %v1221
    %1267 = vst [vmem:[#allocation8 + $0x10] sm:$0xff] %v1260
    // Predicated region
    $region34: #{tpu_custom_call.1} parent=1 // pred_check
      _
    $region35: #{tpu_custom_call.1} parent=1 // pred_check_branch
      %1269 = sbr.rel (0) target = $region37
    $region36: #{tpu_custom_call.1} parent=1 // pred_region
      %s1271 = ssub.s32 384, 384
      %1272 = vsyncadd [#allocation4], %s1271
      %s1274 = sshll.u32 [#allocation8], 4
      %s1275 = int_to_ptr.vmem [resolvable:$true] %s1274
      %1277 = dma.vmem_to_hbm [thread:$0]  %s1275, 384, %s5, [#allocation4]
    $region37: #{tpu_custom_call.1} parent=1 // pred_fallthru
      _
    // Predicated region
    $region38: #{tpu_custom_call.1} parent=1 // pred_check
      _
    $region39: #{tpu_custom_call.1} parent=1 // pred_check_branch
      %1279 = sbr.rel (0) target = $region41
    $region40: #{tpu_custom_call.1} parent=1 // pred_region
      %1280 = dma.done [#allocation4], 384
    $region41: #{tpu_custom_call.1} parent=1 // pred_fallthru
      _
    %1281 = vsyncpa [#allocation3], 1
    %1282 = vsyncpa [#allocation6], 1
    %1283 = vsyncpa [#allocation4], 1

</llo_original>
